<compile_context>
chip_gen: v6e
topology: v6e:2x2x1
jax: 0.10.0
libtpu: 0.0.40
codegen_flags: <defaults>
</compile_context>

<pallas_src>
import functools
import math

import jax
import jax.numpy as jnp
from jax.experimental import pallas as pl
from jax.experimental.pallas import tpu as pltpu


def _round_up(x, m):
    return (x + m - 1) // m * m


# ----------------------------------------------------------------------------
# Kernel
# ----------------------------------------------------------------------------
def _critic_kernel(obs_ref, act_ref, slab_ref, out_ref, *,
                   kc, r_w1o, r_w1a, r_w2, r_w3, r_b, n_out):
    obs = obs_ref[...]                      # (TB, obs_dim_p) f32, 8-aligned K
    act = act_ref[...]                      # (TB, act_dim_p) f32, 8-aligned K
    d_o = obs.shape[1]
    d_a = act.shape[1]

    # --- layer 1: split matmul replaces torch.cat([obs, act], -1) @ W1 ------
    h = jnp.dot(obs, slab_ref[r_w1o:r_w1o + d_o, :],
                preferred_element_type=jnp.float32)
    h = h + jnp.dot(act, slab_ref[r_w1a:r_w1a + d_a, :],
                    preferred_element_type=jnp.float32)
    h = jnp.maximum(h + slab_ref[r_b:r_b + 1, :], 0.0)           # +b1, ReLU

    # --- layer 2 (block-diagonal across fused critics) -----------------------
    h = jnp.dot(h, slab_ref[r_w2:r_w2 + kc, :],
                preferred_element_type=jnp.float32)
    h = jnp.maximum(h + slab_ref[r_b + 1:r_b + 2, :], 0.0)       # +b2, ReLU

    # --- output layer: critic c's scalar lands on lane c ---------------------
    q = jnp.dot(h, slab_ref[r_w3:r_w3 + kc, :],
                preferred_element_type=jnp.float32)
    q = q + slab_ref[r_b + 2:r_b + 3, :]                          # +b3

    # Lane-dense store: (TB, N) -> (N, TB) on the XLU, keep the n_out critic
    # rows, write one unmasked lane-dense block instead of a 1-wide column.
    out_ref[0] = q.T[0:n_out, :]


# ----------------------------------------------------------------------------
# Host-side parameter packing.
#   critics: sequence of (w1, b1, w2, b2, w3, b3), all critics same sizes,
#            w* stored as (in_features, out_features).
# One f32 slab (R, C*L); per-critic weights are block-diagonal along lanes so
# a single matmul per layer evaluates every fused critic.  Unused rows/lanes
# are zero — this invariant is what makes the L / K padding exact.
# ----------------------------------------------------------------------------
def pack_params(critics, obs_dim, act_dim):
    C = len(critics)
    H1 = critics[0][0].shape[1]
    H2 = critics[0][2].shape[1]
    L = _round_up(max(H1, H2), 8)
    obs_dim_p = _round_up(obs_dim, 8)
    act_dim_p = _round_up(act_dim, 8)
    kc = C * L                                # K for layers 2/3, lane width

    r_w1o = 0
    r_w1a = obs_dim_p
    r_w2 = r_w1a + act_dim_p
    r_w3 = r_w2 + kc
    r_b = r_w3 + kc
    R = _round_up(r_b + 3, 8)

    slab = jnp.zeros((R, kc), dtype=jnp.float32)
    for c, (w1, b1, w2, b2, w3, b3) in enumerate(critics):
        lo = c * L
        slab = slab.at[r_w1o:r_w1o + obs_dim, lo:lo + H1].set(w1[:obs_dim, :])
        slab = slab.at[r_w1a:r_w1a + act_dim, lo:lo + H1].set(w1[obs_dim:, :])
        slab = slab.at[r_w2 + lo:r_w2 + lo + H1, lo:lo + H2].set(w2)
        slab = slab.at[r_w3 + lo:r_w3 + lo + H2, c:c + 1].set(w3)
        slab = slab.at[r_b, lo:lo + H1].set(jnp.reshape(b1, (-1,)))
        slab = slab.at[r_b + 1, lo:lo + H2].set(jnp.reshape(b2, (-1,)))
        slab = slab.at[r_b + 2, c].set(jnp.reshape(b3, (-1,))[0])

    meta = dict(obs_dim=obs_dim, act_dim=act_dim,
                obs_dim_p=obs_dim_p, act_dim_p=act_dim_p,
                n_critics=C, kc=kc,
                r_w1o=r_w1o, r_w1a=r_w1a, r_w2=r_w2, r_w3=r_w3, r_b=r_b)
    return slab, meta


# ----------------------------------------------------------------------------
# Batch-tile choice (per the review):
#   * large B  -> ~2 grid steps ("parallel" lets v7x shard across its 2 TCs)
#   * small B  -> 1 step (grid-step overhead dominates on single-TC v5e/v6e)
#   * 128-row alignment once tiles are big enough (unmasked lane-dense stores)
# ----------------------------------------------------------------------------
def _choose_tb(B, max_block_b):
    steps = 2 if B >= 256 else 1
    tb = -(-max(B, 1) // steps)
    align = 128 if tb >= 128 else 8
    tb = _round_up(max(tb, 8), align)
    return min(tb, max_block_b)


# ----------------------------------------------------------------------------
# Wrapper
# ----------------------------------------------------------------------------
def mlp_critic_forward(obs, act, slab, meta, *, max_block_b=4096):
    """Fused MLPCritic forward.

    Returns q of shape (B,) for a single packed critic, or (n_critics, B) when
    several critics were packed into the slab (SAC Q1/Q2 fusion).
    """
    B = obs.shape[0]
    obs_dim, act_dim = meta["obs_dim"], meta["act_dim"]
    obs_dim_p, act_dim_p = meta["obs_dim_p"], meta["act_dim_p"]
    C = meta["n_critics"]
    R, N = slab.shape

    TB = _choose_tb(B, max_block_b)
    Bp = _round_up(max(B, 1), TB)
    G = Bp // TB

    # Zero-pad batch rows (sliced away below) and feature columns (zero cols
    # hit zero slab rows, so results are unchanged but every K is 8-aligned).
    if Bp != B or obs_dim_p != obs_dim:
        obs = jnp.pad(obs, ((0, Bp - B), (0, obs_dim_p - obs_dim)))
    if Bp != B or act_dim_p != act_dim:
        act = jnp.pad(act, ((0, Bp - B), (0, act_dim_p - act_dim)))

    kernel = functools.partial(
        _critic_kernel,
        kc=meta["kc"], r_w1o=meta["r_w1o"], r_w1a=meta["r_w1a"],
        r_w2=meta["r_w2"], r_w3=meta["r_w3"], r_b=meta["r_b"],
        n_out=C)

    out = pl.pallas_call(
        kernel,
        out_shape=jax.ShapeDtypeStruct((G, C, TB), jnp.float32),
        grid_spec=pltpu.PrefetchScalarGridSpec(
            num_scalar_prefetch=0,
            grid=(G,),
            in_specs=[
                pl.BlockSpec((TB, obs_dim_p), lambda i: (i, 0)),
                pl.BlockSpec((TB, act_dim_p), lambda i: (i, 0)),
                # Same block index every step -> weight slab stays VMEM
                # resident, DMA'd once.
                pl.BlockSpec((R, N), lambda i: (0, 0)),
            ],
            # Lane-dense output block: batch rides the lane axis.
            out_specs=pl.BlockSpec((1, C, TB), lambda i: (i, 0, 0)),
        ),
        compiler_params=pltpu.CompilerParams(
            dimension_semantics=("parallel",)),
    )(obs, act, slab)

    # (G, C, TB) -> (C, Bp) -> drop batch padding.  Padded rows carry garbage
    # (biases propagate through) so never reduce over them upstream.
    q = jnp.transpose(out, (1, 0, 2)).reshape(C, Bp)[:, :B]
    if C == 1:
        return q[0]                     # matches torch.squeeze(..., -1)
    return q


# ----------------------------------------------------------------------------
# Deterministic init matching layer_init() semantics.
#   hidden layers: kaiming_uniform_ (relu) -> U(-sqrt(6/fan_in), +sqrt(6/fan_in))
#   output layer:  U(-0.003, 0.003); biases: 0.0
# Weights stored transposed as (in_features, out_features).
# ----------------------------------------------------------------------------
def init_params(key, obs_dim, act_dim, hidden_sizes):
    sizes = [obs_dim + act_dim] + list(hidden_sizes) + [1]
    params = []
    keys = jax.random.split(key, len(sizes) - 1)
    for j in range(len(sizes) - 1):
        fan_in, fan_out = sizes[j], sizes[j + 1]
        if j < len(sizes) - 2:
            bound = math.sqrt(6.0 / fan_in)
        else:
            bound = 0.003
        w = jax.random.uniform(keys[j], (fan_in, fan_out),
                               minval=-bound, maxval=bound, dtype=jnp.float32)
        b = jnp.zeros((1, fan_out), dtype=jnp.float32)
        params += [w, b]
    return tuple(params)


def _reference_q(p, obs, act):
    w1, b1, w2, b2, w3, b3 = p
    x = jnp.concatenate([obs, act], axis=-1)
    h1 = jnp.maximum(x @ w1 + b1, 0.0)
    h2 = jnp.maximum(h1 @ w2 + b2, 0.0)
    return jnp.squeeze(h2 @ w3 + b3, axis=-1)


if __name__ == "__main__":
    B = 4
    obs_dim = 12
    act_dim = 4
    hidden_sizes = (32, 32)

    key = jax.random.PRNGKey(0)
    k_obs, k_act, k_p1, k_p2 = jax.random.split(key, 4)

    obs = jax.random.normal(k_obs, (B, obs_dim), dtype=jnp.float32)
    act = jax.random.normal(k_act, (B, act_dim), dtype=jnp.float32)
    params_q1 = init_params(k_p1, obs_dim, act_dim, hidden_sizes)
    params_q2 = init_params(k_p2, obs_dim, act_dim, hidden_sizes)

    # --- single critic: exact MLPCritic.forward semantics --------------------
    slab1, meta1 = pack_params([params_q1], obs_dim, act_dim)
    q = mlp_critic_forward(obs, act, slab1, meta1)
    jax.block_until_ready(q)
    q_ref = _reference_q(params_q1, obs, act)
    assert q.shape == (B,), q.shape
    assert jnp.allclose(q, q_ref, atol=1e-5, rtol=1e-5), (q, q_ref)

    # --- fused SAC Q1/Q2: two critics in one pallas_call ---------------------
    slab12, meta12 = pack_params([params_q1, params_q2], obs_dim, act_dim)
    q12 = mlp_critic_forward(obs, act, slab12, meta12)
    jax.block_until_ready(q12)
    assert q12.shape == (2, B), q12.shape
    assert jnp.allclose(q12[0], _reference_q(params_q1, obs, act),
                        atol=1e-5, rtol=1e-5)
    assert jnp.allclose(q12[1], _reference_q(params_q2, obs, act),
                        atol=1e-5, rtol=1e-5)

    print("KERNEL_OK")
</pallas_src>

<mosaic_0001>
module attributes {stable_mosaic.version = 11 : i64} {
  func.func @_critic_kernel(%arg0: i32, %arg1: memref<8x16xf32, #tpu.memory_space<vmem>>, %arg2: memref<8x8xf32, #tpu.memory_space<vmem>>, %arg3: memref<96x32xf32, #tpu.memory_space<vmem>>, %arg4: memref<1x1x8xf32, #tpu.memory_space<vmem>>) attributes {dimension_semantics = [#tpu.dimension_semantics<parallel>], iteration_bounds = array<i64: 1>, scalar_prefetch = 0 : i64, scratch_operands = 0 : i64, tpu.core_type = #tpu.core_type<tc>, window_params = [{transform_indices = @transform_0, window_bounds = array<i64: 8, 16>}, {transform_indices = @transform_1, window_bounds = array<i64: 8, 8>}, {pipeline_mode = #tpu.pipeline_mode<synchronous>, transform_indices = @transform_2, window_bounds = array<i64: 96, 32>}, {transform_indices = @transform_3, window_bounds = array<i64: 1, 1, 8>}]} {
    %c0 = arith.constant 0 : index
    %c0_0 = arith.constant 0 : index
    %0 = vector.load %arg1[%c0, %c0_0] : memref<8x16xf32, #tpu.memory_space<vmem>>, vector<8x16xf32>
    %c0_1 = arith.constant 0 : index
    %c0_2 = arith.constant 0 : index
    %1 = vector.load %arg2[%c0_1, %c0_2] : memref<8x8xf32, #tpu.memory_space<vmem>>, vector<8x8xf32>
    %c0_3 = arith.constant 0 : index
    %c0_4 = arith.constant 0 : index
    %2 = vector.load %arg3[%c0_3, %c0_4] : memref<96x32xf32, #tpu.memory_space<vmem>>, vector<16x32xf32>
    %cst = arith.constant dense<0.000000e+00> : vector<8x32xf32>
    %3 = tpu.matmul %0, %2, %cst {dimension_numbers = #tpu.dot_dimension_numbers<[1], [0], [0], [1], [0, 0, 1, 1], [], []>} : vector<8x16xf32>, vector<16x32xf32>, vector<8x32xf32> -> vector<8x32xf32>
    %c16 = arith.constant 16 : index
    %c0_5 = arith.constant 0 : index
    %4 = vector.load %arg3[%c16, %c0_5] : memref<96x32xf32, #tpu.memory_space<vmem>>, vector<8x32xf32>
    %cst_6 = arith.constant dense<0.000000e+00> : vector<8x32xf32>
    %5 = tpu.matmul %1, %4, %cst_6 {dimension_numbers = #tpu.dot_dimension_numbers<[1], [0], [0], [1], [0, 0, 1, 1], [], []>} : vector<8x8xf32>, vector<8x32xf32>, vector<8x32xf32> -> vector<8x32xf32>
    %6 = arith.addf %3, %5 : vector<8x32xf32>
    %c88 = arith.constant 88 : index
    %c0_7 = arith.constant 0 : index
    %7 = vector.load %arg3[%c88, %c0_7] : memref<96x32xf32, #tpu.memory_space<vmem>>, vector<1x32xf32>
    %8 = vector.broadcast %7 : vector<1x32xf32> to vector<8x32xf32>
    %9 = arith.addf %6, %8 : vector<8x32xf32>
    %cst_8 = arith.constant 0.000000e+00 : f32
    %10 = vector.broadcast %cst_8 : f32 to vector<8x32xf32>
    %11 = arith.maximumf %9, %10 : vector<8x32xf32>
    %c24 = arith.constant 24 : index
    %c0_9 = arith.constant 0 : index
    %12 = vector.load %arg3[%c24, %c0_9] : memref<96x32xf32, #tpu.memory_space<vmem>>, vector<32x32xf32>
    %cst_10 = arith.constant dense<0.000000e+00> : vector<8x32xf32>
    %13 = tpu.matmul %11, %12, %cst_10 {dimension_numbers = #tpu.dot_dimension_numbers<[1], [0], [0], [1], [0, 0, 1, 1], [], []>} : vector<8x32xf32>, vector<32x32xf32>, vector<8x32xf32> -> vector<8x32xf32>
    %c89 = arith.constant 89 : index
    %c0_11 = arith.constant 0 : index
    %14 = vector.load %arg3[%c89, %c0_11] : memref<96x32xf32, #tpu.memory_space<vmem>>, vector<1x32xf32>
    %15 = vector.broadcast %14 : vector<1x32xf32> to vector<8x32xf32>
    %16 = arith.addf %13, %15 : vector<8x32xf32>
    %cst_12 = arith.constant 0.000000e+00 : f32
    %17 = vector.broadcast %cst_12 : f32 to vector<8x32xf32>
    %18 = arith.maximumf %16, %17 : vector<8x32xf32>
    %c56 = arith.constant 56 : index
    %c0_13 = arith.constant 0 : index
    %19 = vector.load %arg3[%c56, %c0_13] : memref<96x32xf32, #tpu.memory_space<vmem>>, vector<32x32xf32>
    %cst_14 = arith.constant dense<0.000000e+00> : vector<8x32xf32>
    %20 = tpu.matmul %18, %19, %cst_14 {dimension_numbers = #tpu.dot_dimension_numbers<[1], [0], [0], [1], [0, 0, 1, 1], [], []>} : vector<8x32xf32>, vector<32x32xf32>, vector<8x32xf32> -> vector<8x32xf32>
    %c90 = arith.constant 90 : index
    %c0_15 = arith.constant 0 : index
    %21 = vector.load %arg3[%c90, %c0_15] : memref<96x32xf32, #tpu.memory_space<vmem>>, vector<1x32xf32>
    %22 = vector.broadcast %21 : vector<1x32xf32> to vector<8x32xf32>
    %23 = arith.addf %20, %22 : vector<8x32xf32>
    %24 = tpu.transpose %23, [1, 0] : vector<8x32xf32> -> vector<32x8xf32>
    %25 = vector.extract_strided_slice %24 {offsets = [0, 0], sizes = [1, 8], strides = [1, 1]} : vector<32x8xf32> to vector<1x8xf32>
    %c0_16 = arith.constant 0 : index
    %c0_17 = arith.constant 0 : index
    %c0_18 = arith.constant 0 : index
    %26 = vector.load %arg4[%c0_16, %c0_17, %c0_18] : memref<1x1x8xf32, #tpu.memory_space<vmem>>, vector<1x1x8xf32>
    %27 = vector.shape_cast %26 : vector<1x1x8xf32> to vector<1x8xf32>
    %28 = vector.shape_cast %25 : vector<1x8xf32> to vector<1x1x8xf32>
    tpu.vector_store %arg4[%c0_16, %c0_17, %c0_18], %28 {strides = array<i32>} : memref<1x1x8xf32, #tpu.memory_space<vmem>>, vector<1x1x8xf32>,
    return
  }
  func.func @transform_0(%arg0: i32) -> (i32, i32) {
    %c0_i32 = arith.constant 0 : i32
    %c0_i32_0 = arith.constant 0 : i32
    return %arg0, %c0_i32 : i32, i32
  }
  func.func @transform_1(%arg0: i32) -> (i32, i32) {
    %c0_i32 = arith.constant 0 : i32
    %c0_i32_0 = arith.constant 0 : i32
    return %arg0, %c0_i32 : i32, i32
  }
  func.func @transform_2(%arg0: i32) -> (i32, i32) {
    %c0_i32 = arith.constant 0 : i32
    %c0_i32_0 = arith.constant 0 : i32
    %c0_i32_1 = arith.constant 0 : i32
    return %c0_i32, %c0_i32_0 : i32, i32
  }
  func.func @transform_3(%arg0: i32) -> (i32, i32, i32) {
    %c0_i32 = arith.constant 0 : i32
    %c0_i32_0 = arith.constant 0 : i32
    %c0_i32_1 = arith.constant 0 : i32
    return %arg0, %c0_i32, %c0_i32_0 : i32, i32, i32
  }
}

</mosaic_0001>

<llo_original>
// kernel: tpu_custom_call.1
$region0: #{tpu_custom_call.1}
  #allocation0 [shape = 'u32[]', space=smem, size = 0x4, offset = 0x4, fixed_abs, tag = 'smem constant byte address 0x4 - core index']
  #allocation1 [shape = 'u32[144,128]{1,0:T(1,128)}', space=vmem, size = 0x12000, scoped, tag = 'internal scratch']
  %s0 = inlined_call_operand.vmem [shape: f32[8,16], index: 0, kind: input, shape index: {}]
  %s1 = inlined_call_operand.vmem [shape: f32[8,8], index: 1, kind: input, shape index: {}]
  %s2 = inlined_call_operand.vmem [shape: f32[96,32], index: 2, kind: input, shape index: {}]
  %s3 = inlined_call_operand.hbm [shape: f32[1,1,8], index: 3, kind: output, shape index: {}]
  %s4 = sld [smem:[#allocation0]]
  $region22: #{tpu_custom_call.1} parent=0
    _
  %s6 = ssub.s32 1, %s4
  %s7 = scalar_select 0, %s6, %s4
  $region1: #{tpu_custom_call.1} parent=0
    #allocation2 [shape = 'u8[512]{0}', space=vmem, size = 0x400, scoped, tag = 'output window, operand 0, single buffered']
    #allocation3 [shape = 's32[1]{0}', space=sflag, size = 0x4, scoped, tag = 'scoped memory for tpu_custom_call.1']
    %8 = vsyncpa [#allocation3], 0
    // Predicated region
    $region2: #{tpu_custom_call.1} parent=1 // pred_check
      _
    $region3: #{tpu_custom_call.1} parent=1 // pred_check_branch
      %10 = sbr.rel (0) target = $region5
    $region4: #{tpu_custom_call.1} parent=1 // pred_region
      _
    $region5: #{tpu_custom_call.1} parent=1 // pred_fallthru
      _
    // Predicated region
    $region6: #{tpu_custom_call.1} parent=1 // pred_check
      _
    $region7: #{tpu_custom_call.1} parent=1 // pred_check_branch
      %12 = sbr.rel (0) target = $region9
    $region8: #{tpu_custom_call.1} parent=1 // pred_region
      _
    $region9: #{tpu_custom_call.1} parent=1 // pred_fallthru
      _
    // Predicated region
    $region10: #{tpu_custom_call.1} parent=1 // pred_check
      _
    $region11: #{tpu_custom_call.1} parent=1 // pred_check_branch
      %14 = sbr.rel (0) target = $region13
    $region12: #{tpu_custom_call.1} parent=1 // pred_region
      _
    $region13: #{tpu_custom_call.1} parent=1 // pred_fallthru
      _
    %v15 = vld [vmem:[%s0] sm:$0xff]
    %v16 = vld [vmem:[%s1] sm:$0xff]
    %v17 = vld [vmem:[%s2] sm:$0xff]
    %v18 = vld [vmem:[%s2 + $0x8] sm:$0xff]
    %v19 = vld [vmem:[%s2 + $0x10] sm:$0xff]
    %vm20 = vcmask 64512
    %v22 = vsel %vm20, %v16, 0
    %24 = vmatprep.subr.mxu0 0.0
    %25 = vmatpush1.msra.mxu0 0.0
    %26 = vmatprep.subr.mxu0 0.0
    %27 = vmatpush1.msra.mxu0 0.0
    %28 = vmatprep.subr.mxu0 0.0
    %29 = vmatpush1.msra.mxu0 0.0
    %30 = vmatprep.subr.mxu0 0.0
    %31 = vmatpush1.msra.mxu0 0.0
    %32 = vmatprep.subr.mxu0 0.0
    %33 = vmatpush1.msra.mxu0 0.0
    %34 = vmatprep.subr.mxu0 0.0
    %35 = vmatpush1.msra.mxu0 0.0
    %36 = vmatprep.subr.mxu0 0.0
    %37 = vmatpush1.msra.mxu0 0.0
    %38 = vmatprep.subr.mxu0 0.0
    %39 = vmatpush1.msra.mxu0 0.0
    %40 = vmatprep.subr.mxu0 0.0
    %41 = vmatpush1.msra.mxu0 0.0
    %42 = vmatprep.subr.mxu0 0.0
    %43 = vmatpush1.msra.mxu0 0.0
    %44 = vmatprep.subr.mxu0 0.0
    %45 = vmatpush1.msra.mxu0 0.0
    %46 = vmatprep.subr.mxu0 0.0
    %47 = vmatpush1.msra.mxu0 0.0
    %48 = vmatprep.subr.mxu0 0.0
    %49 = vmatpush1.msra.mxu0 0.0
    %50 = vmatprep.subr.mxu0 0.0
    %51 = vmatpush1.msra.mxu0 0.0
    %52 = vmatprep.subr.mxu0 0.0
    %53 = vmatpush1.msra.mxu0 0.0
    %54 = vmatprep.subr.mxu0 0.0
    %55 = vmatpush1.msra.mxu0 %v19
    %56 = vmatprep.subr.mxu0 0.0
    %57 = vmatpush2.msra.mxu0 0.0
    %58 = vmatprep.subr.mxu0 0.0
    %59 = vmatpush2.msra.mxu0 0.0
    %60 = vmatprep.subr.mxu0 0.0
    %61 = vmatpush2.msra.mxu0 0.0
    %62 = vmatprep.subr.mxu0 0.0
    %63 = vmatpush2.msra.mxu0 0.0
    %64 = vmatprep.subr.mxu0 0.0
    %65 = vmatpush2.msra.mxu0 0.0
    %66 = vmatprep.subr.mxu0 0.0
    %67 = vmatpush2.msra.mxu0 0.0
    %68 = vmatprep.subr.mxu0 0.0
    %69 = vmatpush2.msra.mxu0 0.0
    %70 = vmatprep.subr.mxu0 0.0
    %71 = vmatpush2.msra.mxu0 0.0
    %72 = vmatprep.subr.mxu0 0.0
    %73 = vmatpush2.msra.mxu0 0.0
    %74 = vmatprep.subr.mxu0 0.0
    %75 = vmatpush2.msra.mxu0 0.0
    %76 = vmatprep.subr.mxu0 0.0
    %77 = vmatpush2.msra.mxu0 0.0
    %78 = vmatprep.subr.mxu0 0.0
    %79 = vmatpush2.msra.mxu0 0.0
    %80 = vmatprep.subr.mxu0 0.0
    %81 = vmatpush2.msra.mxu0 0.0
    %82 = vmatprep.subr.mxu0 0.0
    %83 = vmatpush2.msra.mxu0 0.0
    %84 = vmatprep.subr.mxu0 0.0
    %85 = vmatpush2.msra.mxu0 0.0
    %86 = vmatprep.subr.mxu0 0.0
    %87 = vmatpush2.msra.mxu0 0.0
    %88 = vmatprep.mubr.f32.mxu0 0.0
    %89 = vmatmul.mubr.f32.gmra.mxu0 %v22
    %v90 = vpop.f32.mrf.mxu0
    %v91 = vadd.f32 0.0, %v90
    %v92 = vpop.f32.mrf.mxu0
    %93 = vdwg.mxu0
    %vm94 = vcmask 130048
    %v96 = vsel %vm94, %v15, 0
    %98 = vmatprep.subr.mxu0 0.0
    %99 = vmatpush1.msra.mxu0 0.0
    %100 = vmatprep.subr.mxu0 0.0
    %101 = vmatpush1.msra.mxu0 0.0
    %102 = vmatprep.subr.mxu0 0.0
    %103 = vmatpush1.msra.mxu0 0.0
    %104 = vmatprep.subr.mxu0 0.0
    %105 = vmatpush1.msra.mxu0 0.0
    %106 = vmatprep.subr.mxu0 0.0
    %107 = vmatpush1.msra.mxu0 0.0
    %108 = vmatprep.subr.mxu0 0.0
    %109 = vmatpush1.msra.mxu0 0.0
    %110 = vmatprep.subr.mxu0 0.0
    %111 = vmatpush1.msra.mxu0 0.0
    %112 = vmatprep.subr.mxu0 0.0
    %113 = vmatpush1.msra.mxu0 0.0
    %114 = vmatprep.subr.mxu0 0.0
    %115 = vmatpush1.msra.mxu0 0.0
    %116 = vmatprep.subr.mxu0 0.0
    %117 = vmatpush1.msra.mxu0 0.0
    %118 = vmatprep.subr.mxu0 0.0
    %119 = vmatpush1.msra.mxu0 0.0
    %120 = vmatprep.subr.mxu0 0.0
    %121 = vmatpush1.msra.mxu0 0.0
    %122 = vmatprep.subr.mxu0 0.0
    %123 = vmatpush1.msra.mxu0 0.0
    %124 = vmatprep.subr.mxu0 0.0
    %125 = vmatpush1.msra.mxu0 0.0
    %126 = vmatprep.subr.mxu0 0.0
    %127 = vmatpush1.msra.mxu0 %v18
    %128 = vmatprep.subr.mxu0 0.0
    %129 = vmatpush1.msra.mxu0 %v17
    %130 = vmatprep.subr.mxu0 0.0
    %131 = vmatpush2.msra.mxu0 0.0
    %132 = vmatprep.subr.mxu0 0.0
    %133 = vmatpush2.msra.mxu0 0.0
    %134 = vmatprep.subr.mxu0 0.0
    %135 = vmatpush2.msra.mxu0 0.0
    %136 = vmatprep.subr.mxu0 0.0
    %137 = vmatpush2.msra.mxu0 0.0
    %138 = vmatprep.subr.mxu0 0.0
    %139 = vmatpush2.msra.mxu0 0.0
    %140 = vmatprep.subr.mxu0 0.0
    %141 = vmatpush2.msra.mxu0 0.0
    %142 = vmatprep.subr.mxu0 0.0
    %143 = vmatpush2.msra.mxu0 0.0
    %144 = vmatprep.subr.mxu0 0.0
    %145 = vmatpush2.msra.mxu0 0.0
    %146 = vmatprep.subr.mxu0 0.0
    %147 = vmatpush2.msra.mxu0 0.0
    %148 = vmatprep.subr.mxu0 0.0
    %149 = vmatpush2.msra.mxu0 0.0
    %150 = vmatprep.subr.mxu0 0.0
    %151 = vmatpush2.msra.mxu0 0.0
    %152 = vmatprep.subr.mxu0 0.0
    %153 = vmatpush2.msra.mxu0 0.0
    %154 = vmatprep.subr.mxu0 0.0
    %155 = vmatpush2.msra.mxu0 0.0
    %156 = vmatprep.subr.mxu0 0.0
    %157 = vmatpush2.msra.mxu0 0.0
    %158 = vmatprep.subr.mxu0 0.0
    %159 = vmatpush2.msra.mxu0 0.0
    %160 = vmatprep.subr.mxu0 0.0
    %161 = vmatpush2.msra.mxu0 0.0
    %162 = vmatprep.mubr.f32.mxu0 0.0
    %163 = vmatmul.mubr.f32.gmra.mxu0 %v96
    %v164 = vpop.f32.mrf.mxu0
    %v165 = vadd.f32 %v91, %v164
    %v166 = vpop.f32.mrf.mxu0
    %167 = vdwg.mxu0
    %v168 = vld [vmem:[%s2 + $0x58] sm:$0x1]
    %v169 = vlaneseq
    %v170 = vshrl.u32 %v169, 7
    %v171 = vsub.s32 0, %v170
    %v172 = vrot.slane %v168, %v171
    %v173 = vadd.f32 %v165, %v172
    %v174 = vmax.f32 %v173, 0.0
    %v175 = vld [vmem:[%s2 + $0x18] sm:$0xff]
    %v176 = vld [vmem:[%s2 + $0x20] sm:$0xff]
    %v177 = vld [vmem:[%s2 + $0x28] sm:$0xff]
    %v178 = vld [vmem:[%s2 + $0x30] sm:$0xff]
    %v179 = vld [vmem:[%s2 + $0x59] sm:$0x1]
    %v180 = vlaneseq
    %v181 = vshrl.u32 %v180, 7
    %v182 = vsub.s32 0, %v181
    %v183 = vrot.slane %v179, %v182
    %vm184 = vcmask 261120
    %v186 = vsel %vm184, %v174, 0
    %188 = vmatprep.subr.mxu0 0.0
    %189 = vmatpush1.msra.mxu0 0.0
    %190 = vmatprep.subr.mxu0 0.0
    %191 = vmatpush1.msra.mxu0 0.0
    %192 = vmatprep.subr.mxu0 0.0
    %193 = vmatpush1.msra.mxu0 0.0
    %194 = vmatprep.subr.mxu0 0.0
    %195 = vmatpush1.msra.mxu0 0.0
    %196 = vmatprep.subr.mxu0 0.0
    %197 = vmatpush1.msra.mxu0 0.0
    %198 = vmatprep.subr.mxu0 0.0
    %199 = vmatpush1.msra.mxu0 0.0
    %200 = vmatprep.subr.mxu0 0.0
    %201 = vmatpush1.msra.mxu0 0.0
    %202 = vmatprep.subr.mxu0 0.0
    %203 = vmatpush1.msra.mxu0 0.0
    %204 = vmatprep.subr.mxu0 0.0
    %205 = vmatpush1.msra.mxu0 0.0
    %206 = vmatprep.subr.mxu0 0.0
    %207 = vmatpush1.msra.mxu0 0.0
    %208 = vmatprep.subr.mxu0 0.0
    %209 = vmatpush1.msra.mxu0 0.0
    %210 = vmatprep.subr.mxu0 0.0
    %211 = vmatpush1.msra.mxu0 0.0
    %212 = vmatprep.subr.mxu0 0.0
    %213 = vmatpush1.msra.mxu0 %v178
    %214 = vmatprep.subr.mxu0 0.0
    %215 = vmatpush1.msra.mxu0 %v177
    %216 = vmatprep.subr.mxu0 0.0
    %217 = vmatpush1.msra.mxu0 %v176
    %218 = vmatprep.subr.mxu0 0.0
    %219 = vmatpush1.msra.mxu0 %v175
    %220 = vmatprep.subr.mxu0 0.0
    %221 = vmatpush2.msra.mxu0 0.0
    %222 = vmatprep.subr.mxu0 0.0
    %223 = vmatpush2.msra.mxu0 0.0
    %224 = vmatprep.subr.mxu0 0.0
    %225 = vmatpush2.msra.mxu0 0.0
    %226 = vmatprep.subr.mxu0 0.0
    %227 = vmatpush2.msra.mxu0 0.0
    %228 = vmatprep.subr.mxu0 0.0
    %229 = vmatpush2.msra.mxu0 0.0
    %230 = vmatprep.subr.mxu0 0.0
    %231 = vmatpush2.msra.mxu0 0.0
    %232 = vmatprep.subr.mxu0 0.0
    %233 = vmatpush2.msra.mxu0 0.0
    %234 = vmatprep.subr.mxu0 0.0
    %235 = vmatpush2.msra.mxu0 0.0
    %236 = vmatprep.subr.mxu0 0.0
    %237 = vmatpush2.msra.mxu0 0.0
    %238 = vmatprep.subr.mxu0 0.0
    %239 = vmatpush2.msra.mxu0 0.0
    %240 = vmatprep.subr.mxu0 0.0
    %241 = vmatpush2.msra.mxu0 0.0
    %242 = vmatprep.subr.mxu0 0.0
    %243 = vmatpush2.msra.mxu0 0.0
    %244 = vmatprep.subr.mxu0 0.0
    %245 = vmatpush2.msra.mxu0 0.0
    %246 = vmatprep.subr.mxu0 0.0
    %247 = vmatpush2.msra.mxu0 0.0
    %248 = vmatprep.subr.mxu0 0.0
    %249 = vmatpush2.msra.mxu0 0.0
    %250 = vmatprep.subr.mxu0 0.0
    %251 = vmatpush2.msra.mxu0 0.0
    %252 = vmatprep.mubr.f32.mxu0 0.0
    %253 = vmatmul.mubr.f32.gmra.mxu0 %v186
    %v254 = vpop.f32.mrf.mxu0
    %v255 = vadd.f32 %v183, %v254
    %v256 = vpop.f32.mrf.mxu0
    %257 = vdwg.mxu0
    %v258 = vmax.f32 %v255, 0.0
    %v259 = vld [vmem:[%s2 + $0x38] sm:$0xff]
    %v260 = vld [vmem:[%s2 + $0x40] sm:$0xff]
    %v261 = vld [vmem:[%s2 + $0x48] sm:$0xff]
    %v262 = vld [vmem:[%s2 + $0x50] sm:$0xff]
    %v263 = vld [vmem:[%s2 + $0x5a] sm:$0x1]
    %v264 = vlaneseq
    %v265 = vshrl.u32 %v264, 7
    %v266 = vsub.s32 0, %v265
    %v267 = vrot.slane %v263, %v266
    %v269 = vsel %vm184, %v258, 0
    %271 = vmatprep.subr.mxu0 0.0
    %272 = vmatpush1.msra.mxu0 0.0
    %273 = vmatprep.subr.mxu0 0.0
    %274 = vmatpush1.msra.mxu0 0.0
    %275 = vmatprep.subr.mxu0 0.0
    %276 = vmatpush1.msra.mxu0 0.0
    %277 = vmatprep.subr.mxu0 0.0
    %278 = vmatpush1.msra.mxu0 0.0
    %279 = vmatprep.subr.mxu0 0.0
    %280 = vmatpush1.msra.mxu0 0.0
    %281 = vmatprep.subr.mxu0 0.0
    %282 = vmatpush1.msra.mxu0 0.0
    %283 = vmatprep.subr.mxu0 0.0
    %284 = vmatpush1.msra.mxu0 0.0
    %285 = vmatprep.subr.mxu0 0.0
    %286 = vmatpush1.msra.mxu0 0.0
    %287 = vmatprep.subr.mxu0 0.0
    %288 = vmatpush1.msra.mxu0 0.0
    %289 = vmatprep.subr.mxu0 0.0
    %290 = vmatpush1.msra.mxu0 0.0
    %291 = vmatprep.subr.mxu0 0.0
    %292 = vmatpush1.msra.mxu0 0.0
    %293 = vmatprep.subr.mxu0 0.0
    %294 = vmatpush1.msra.mxu0 0.0
    %295 = vmatprep.subr.mxu0 0.0
    %296 = vmatpush1.msra.mxu0 %v262
    %297 = vmatprep.subr.mxu0 0.0
    %298 = vmatpush1.msra.mxu0 %v261
    %299 = vmatprep.subr.mxu0 0.0
    %300 = vmatpush1.msra.mxu0 %v260
    %301 = vmatprep.subr.mxu0 0.0
    %302 = vmatpush1.msra.mxu0 %v259
    %303 = vmatprep.subr.mxu0 0.0
    %304 = vmatpush2.msra.mxu0 0.0
    %305 = vmatprep.subr.mxu0 0.0
    %306 = vmatpush2.msra.mxu0 0.0
    %307 = vmatprep.subr.mxu0 0.0
    %308 = vmatpush2.msra.mxu0 0.0
    %309 = vmatprep.subr.mxu0 0.0
    %310 = vmatpush2.msra.mxu0 0.0
    %311 = vmatprep.subr.mxu0 0.0
    %312 = vmatpush2.msra.mxu0 0.0
    %313 = vmatprep.subr.mxu0 0.0
    %314 = vmatpush2.msra.mxu0 0.0
    %315 = vmatprep.subr.mxu0 0.0
    %316 = vmatpush2.msra.mxu0 0.0
    %317 = vmatprep.subr.mxu0 0.0
    %318 = vmatpush2.msra.mxu0 0.0
    %319 = vmatprep.subr.mxu0 0.0
    %320 = vmatpush2.msra.mxu0 0.0
    %321 = vmatprep.subr.mxu0 0.0
    %322 = vmatpush2.msra.mxu0 0.0
    %323 = vmatprep.subr.mxu0 0.0
    %324 = vmatpush2.msra.mxu0 0.0
    %325 = vmatprep.subr.mxu0 0.0
    %326 = vmatpush2.msra.mxu0 0.0
    %327 = vmatprep.subr.mxu0 0.0
    %328 = vmatpush2.msra.mxu0 0.0
    %329 = vmatprep.subr.mxu0 0.0
    %330 = vmatpush2.msra.mxu0 0.0
    %331 = vmatprep.subr.mxu0 0.0
    %332 = vmatpush2.msra.mxu0 0.0
    %333 = vmatprep.subr.mxu0 0.0
    %334 = vmatpush2.msra.mxu0 0.0
    %335 = vmatprep.mubr.f32.mxu0 0.0
    %336 = vmatmul.mubr.f32.gmra.mxu0 %v269
    %v337 = vpop.f32.mrf.mxu0
    %v338 = vadd.f32 %v267, %v337
    %v339 = vpop.f32.mrf.mxu0
    %340 = vdwg.mxu0
    %341 = vxpose.xlu0.b32.start [1/16] %v338, 128
    %342 = vxpose.xlu0.b32.cont [2/16] 0.0, 128
    %343 = vxpose.xlu0.b32.cont [3/16] 0.0, 128
    %344 = vxpose.xlu0.b32.cont [4/16] 0.0, 128
    %345 = vxpose.xlu0.b32.cont [5/16] 0.0, 128
    %346 = vxpose.xlu0.b32.cont [6/16] 0.0, 128
    %347 = vxpose.xlu0.b32.cont [7/16] 0.0, 128
    %348 = vxpose.xlu0.b32.cont [8/16] 0.0, 128
    %349 = vxpose.xlu0.b32.cont [9/16] 0.0, 128
    %350 = vxpose.xlu0.b32.cont [10/16] 0.0, 128
    %351 = vxpose.xlu0.b32.cont [11/16] 0.0, 128
    %352 = vxpose.xlu0.b32.cont [12/16] 0.0, 128
    %353 = vxpose.xlu0.b32.cont [13/16] 0.0, 128
    %354 = vxpose.xlu0.b32.cont [14/16] 0.0, 128
    %355 = vxpose.xlu0.b32.cont [15/16] 0.0, 128
    %356 = vxpose.xlu0.b32.end [16/16] 0.0, 128
    %v357 = vpop.trf.xlu0
    %v358 = vpop.trf.xlu0
    %v359 = vpop.trf.xlu0
    %v360 = vpop.trf.xlu0
    %v361 = vpop.trf.xlu0
    %v362 = vpop.trf.xlu0
    %v363 = vpop.trf.xlu0
    %v364 = vpop.trf.xlu0
    %v365 = vpop.trf.xlu0
    %v366 = vpop.trf.xlu0
    %v367 = vpop.trf.xlu0
    %v368 = vpop.trf.xlu0
    %v369 = vpop.trf.xlu0
    %v370 = vpop.trf.xlu0
    %v371 = vpop.trf.xlu0
    %v372 = vpop.trf.xlu0
    %vm373 = vcmask 57344
    %374 = vst.msk [vmem:[#allocation2] sm:$0x1] %vm373, %v357
    // Predicated region
    $region14: #{tpu_custom_call.1} parent=1 // pred_check
      _
    $region15: #{tpu_custom_call.1} parent=1 // pred_check_branch
      %376 = sbr.rel (0) target = $region17
    $region16: #{tpu_custom_call.1} parent=1 // pred_region
      %s378 = ssub.s32 16, 16
      %379 = vsyncadd [#allocation3], %s378
      %s381 = sshll.u32 [#allocation2], 4
      %s382 = int_to_ptr.vmem [resolvable:$true] %s381
      %384 = dma.vmem_to_hbm [thread:$0]  %s382, 16, %s3, [#allocation3]
    $region17: #{tpu_custom_call.1} parent=1 // pred_fallthru
      _
    // Predicated region
    $region18: #{tpu_custom_call.1} parent=1 // pred_check
      _
    $region19: #{tpu_custom_call.1} parent=1 // pred_check_branch
      %386 = sbr.rel (0) target = $region21
    $region20: #{tpu_custom_call.1} parent=1 // pred_region
      %387 = dma.done [#allocation3], 16
    $region21: #{tpu_custom_call.1} parent=1 // pred_fallthru
      _
    %388 = vsyncpa [#allocation3], 1

</llo_original>
